<compile_context>
chip_gen: v6e
topology: v6e:2x2x1
jax: 0.10.0
libtpu: 0.0.40
codegen_flags: <defaults>
</compile_context>

<pallas_src>
import jax
import jax.numpy as jnp
from jax.experimental import pallas as pl
from jax.experimental.pallas import tpu as pltpu

# ---- PhaseFunction dimensions (synthetic, small) ----------------------------
INPUT_DIM = 4
HIDDEN_DIM = 32
OUTPUT_DIM = 4
PF_OUT_DIM = (INPUT_DIM * HIDDEN_DIM + HIDDEN_DIM
              + HIDDEN_DIM * HIDDEN_DIM + HIDDEN_DIM
              + HIDDEN_DIM * OUTPUT_DIM + OUTPUT_DIM)   # = 1348


def _round_up(x, m):
    return (x + m - 1) // m * m


def phase_function_kernel(phase_ref, wt_ref, o_ref):
    """phase_ref: (tm, 1) f32; wt_ref: (4, D_out) = W.T; o_ref: (tm, D_out)."""
    w = phase_ref[...].astype(jnp.float32)              # (tm, 1)
    # Horner form: a single lane-broadcast of w (vs broadcasting w, w^2, w^3).
    # K = 4 is far too small for the MXU; this VPU FMA chain is fully hidden
    # under the output writeback on v5e/v6e and comfortably fits on v7x.
    # TODO(synk): if a v7x bundle dump shows the VALU slot binding with bf16
    # output, switch to materializing (tm, 4) features + jnp.dot on the MXU.
    out = (wt_ref[0:1, :]
           + w * (wt_ref[1:2, :]
                  + w * (wt_ref[2:3, :]
                         + w * wt_ref[3:4, :])))          # (tm, D_out) f32
    o_ref[...] = out.astype(o_ref.dtype)


def phase_function(phase, weight, *, tm=2048, out_dtype=jnp.bfloat16):
    """phase: (B, T, 1) f32; weight: (PF_OUT_DIM, 4) f32 (nn.Linear layout).

    out_dtype: bfloat16 by default (halves HBM writeback on this store-bound
    kernel); pass jnp.float32 for bit-faithful nn.Linear-in-f32 numerics.
    """
    B, T, one = phase.shape
    assert one == 1
    M = B * T
    d_out = weight.shape[0]

    # Row padding only up to the sublane quantum (<= 7 junk rows); boundary
    # tiles from the cdiv grid are masked, so no full-tile junk writeback.
    M_pad = _round_up(M, 8)
    tm_eff = min(_round_up(tm, 8), M_pad)
    grid = (pl.cdiv(M_pad, tm_eff),)

    phase2d = phase.reshape(M, 1).astype(jnp.float32)    # glue reshape (plain JAX)
    if M_pad != M:
        phase2d = jnp.pad(phase2d, ((0, M_pad - M), (0, 0)))
    wt = weight.T.astype(jnp.float32)                    # (4, d_out), ~21.6 KB, resident

    out = pl.pallas_call(
        phase_function_kernel,
        out_shape=jax.ShapeDtypeStruct((M_pad, d_out), out_dtype),
        grid_spec=pltpu.PrefetchScalarGridSpec(
            num_scalar_prefetch=0,
            grid=grid,
            in_specs=[
                pl.BlockSpec((tm_eff, 1), lambda i: (i, 0)),    # phase rows
                pl.BlockSpec((4, d_out), lambda i: (0, 0)),     # full W.T, grid-resident
            ],
            # Last dim == full array dim (1348): legal and lane-dense enough
            # (10/11 output vreg columns store unmasked); no padded lanes.
            out_specs=pl.BlockSpec((tm_eff, d_out), lambda i: (i, 0)),
        ),
        compiler_params=pltpu.CompilerParams(
            dimension_semantics=("parallel",),
            # 32 MiB scoped VMEM: fits tm=2048 f32 double-buffered output on
            # every generation; must NOT exceed 32 MiB on v7x (64 MiB physical).
            vmem_limit_bytes=32 * 1024 * 1024,
        ),
    )(phase2d, wt)

    if M_pad != M:
        out = out[:M]          # contiguous leading-dim slice: cheap, fuses
    return out.reshape(B, T, d_out)


if __name__ == "__main__":
    key = jax.random.PRNGKey(0)
    k_w, k_p = jax.random.split(key)

    B, T = 2, 8
    # Deterministic init mimicking nn.Linear default: U(-1/sqrt(in), 1/sqrt(in))
    bound = 1.0 / (4.0 ** 0.5)
    weight = jax.random.uniform(k_w, (PF_OUT_DIM, 4), jnp.float32, -bound, bound)
    phase = jax.random.uniform(k_p, (B, T, 1), jnp.float32, 0.0, 2.0 * jnp.pi)

    # Default (bf16 output, the fast path) and the exact f32 path.
    out_bf16 = jax.block_until_ready(phase_function(phase, weight))
    out_f32 = jax.block_until_ready(phase_function(phase, weight, out_dtype=jnp.float32))

    # Pure-JAX reference of the PyTorch forward.
    feats = jnp.concatenate([jnp.ones_like(phase), phase, phase ** 2, phase ** 3],
                            axis=2)                             # (B, T, 4)
    ref = feats @ weight.T                                      # (B, T, PF_OUT_DIM)

    assert out_bf16.shape == (B, T, PF_OUT_DIM) and out_bf16.dtype == jnp.bfloat16
    assert out_f32.shape == (B, T, PF_OUT_DIM) and out_f32.dtype == jnp.float32
    assert jnp.allclose(out_f32, ref, atol=1e-4, rtol=1e-4)
    assert jnp.allclose(out_bf16.astype(jnp.float32), ref, atol=2e-2, rtol=2e-2)
    print("KERNEL_OK")
</pallas_src>

<mosaic_0001>
module attributes {stable_mosaic.version = 11 : i64} {
  func.func @phase_function_kernel(%arg0: i32, %arg1: memref<16x1xf32, #tpu.memory_space<vmem>>, %arg2: memref<4x1348xf32, #tpu.memory_space<vmem>>, %arg3: memref<16x1348xbf16, #tpu.memory_space<vmem>>) attributes {dimension_semantics = [#tpu.dimension_semantics<parallel>], iteration_bounds = array<i64: 1>, scalar_prefetch = 0 : i64, scratch_operands = 0 : i64, tpu.core_type = #tpu.core_type<tc>, window_params = [{transform_indices = @transform_0, window_bounds = array<i64: 16, 1>}, {pipeline_mode = #tpu.pipeline_mode<synchronous>, transform_indices = @transform_1, window_bounds = array<i64: 4, 1348>}, {transform_indices = @transform_2, window_bounds = array<i64: 16, 1348>}]} {
    %c0 = arith.constant 0 : index
    %c0_0 = arith.constant 0 : index
    %0 = vector.load %arg1[%c0, %c0_0] : memref<16x1xf32, #tpu.memory_space<vmem>>, vector<16x1xf32>
    %c0_1 = arith.constant 0 : index
    %c0_2 = arith.constant 0 : index
    %1 = vector.load %arg2[%c0_1, %c0_2] : memref<4x1348xf32, #tpu.memory_space<vmem>>, vector<1x1348xf32>
    %c1 = arith.constant 1 : index
    %c0_3 = arith.constant 0 : index
    %2 = vector.load %arg2[%c1, %c0_3] : memref<4x1348xf32, #tpu.memory_space<vmem>>, vector<1x1348xf32>
    %c2 = arith.constant 2 : index
    %c0_4 = arith.constant 0 : index
    %3 = vector.load %arg2[%c2, %c0_4] : memref<4x1348xf32, #tpu.memory_space<vmem>>, vector<1x1348xf32>
    %c3 = arith.constant 3 : index
    %c0_5 = arith.constant 0 : index
    %4 = vector.load %arg2[%c3, %c0_5] : memref<4x1348xf32, #tpu.memory_space<vmem>>, vector<1x1348xf32>
    %5 = vector.broadcast %0 : vector<16x1xf32> to vector<16x1348xf32>
    %6 = vector.broadcast %4 : vector<1x1348xf32> to vector<16x1348xf32>
    %7 = arith.mulf %5, %6 : vector<16x1348xf32>
    %8 = vector.broadcast %3 : vector<1x1348xf32> to vector<16x1348xf32>
    %9 = arith.addf %8, %7 : vector<16x1348xf32>
    %10 = vector.broadcast %0 : vector<16x1xf32> to vector<16x1348xf32>
    %11 = arith.mulf %10, %9 : vector<16x1348xf32>
    %12 = vector.broadcast %2 : vector<1x1348xf32> to vector<16x1348xf32>
    %13 = arith.addf %12, %11 : vector<16x1348xf32>
    %14 = vector.broadcast %0 : vector<16x1xf32> to vector<16x1348xf32>
    %15 = arith.mulf %14, %13 : vector<16x1348xf32>
    %16 = vector.broadcast %1 : vector<1x1348xf32> to vector<16x1348xf32>
    %17 = arith.addf %16, %15 : vector<16x1348xf32>
    %18 = arith.truncf %17 : vector<16x1348xf32> to vector<16x1348xbf16>
    %c0_6 = arith.constant 0 : index
    %c0_7 = arith.constant 0 : index
    %19 = vector.load %arg3[%c0_6, %c0_7] : memref<16x1348xbf16, #tpu.memory_space<vmem>>, vector<16x1348xbf16>
    tpu.vector_store %arg3[%c0_6, %c0_7], %18 {strides = array<i32>} : memref<16x1348xbf16, #tpu.memory_space<vmem>>, vector<16x1348xbf16>,
    return
  }
  func.func @transform_0(%arg0: i32) -> (i32, i32) {
    %c0_i32 = arith.constant 0 : i32
    %c0_i32_0 = arith.constant 0 : i32
    return %arg0, %c0_i32 : i32, i32
  }
  func.func @transform_1(%arg0: i32) -> (i32, i32) {
    %c0_i32 = arith.constant 0 : i32
    %c0_i32_0 = arith.constant 0 : i32
    %c0_i32_1 = arith.constant 0 : i32
    return %c0_i32, %c0_i32_0 : i32, i32
  }
  func.func @transform_2(%arg0: i32) -> (i32, i32) {
    %c0_i32 = arith.constant 0 : i32
    %c0_i32_0 = arith.constant 0 : i32
    return %arg0, %c0_i32 : i32, i32
  }
}

</mosaic_0001>

<llo_original>
// kernel: tpu_custom_call.1
$region0: #{tpu_custom_call.1}
  #allocation0 [shape = 'u32[]', space=smem, size = 0x4, offset = 0x4, fixed_abs, tag = 'smem constant byte address 0x4 - core index']
  #allocation1 [shape = 'u32[144,128]{1,0:T(1,128)}', space=vmem, size = 0x12000, scoped, tag = 'internal scratch']
  %s0 = inlined_call_operand.vmem [shape: f32[16,1], index: 0, kind: input, shape index: {}]
  %s1 = inlined_call_operand.hbm [shape: f32[4,1348], index: 1, kind: input, shape index: {}]
  %s2 = inlined_call_operand.hbm [shape: bf16[16,1348], index: 2, kind: output, shape index: {}]
  %s3 = sld [smem:[#allocation0]]
  $region22: #{tpu_custom_call.1} parent=0
    _
  %s5 = ssub.s32 1, %s3
  %s6 = scalar_select 0, %s5, %s3
  $region1: #{tpu_custom_call.1} parent=0
    #allocation2 [shape = 'u8[22528]{0}', space=vmem, size = 0x5800, scoped, tag = 'input window, operand 1, single buffered']
    #allocation3 [shape = 's32[1]{0}', space=sflag, size = 0x4, scoped, tag = 'scoped memory for tpu_custom_call.1']
    #allocation4 [shape = 's32[1]{0}', space=sflag, size = 0x4, scoped, tag = 'scoped memory for tpu_custom_call.1']
    #allocation5 [shape = 'u8[45056]{0}', space=vmem, size = 0xb000, scoped, tag = 'output window, operand 0, single buffered']
    %7 = vsyncpa [#allocation3], 0
    %8 = vsyncpa [#allocation4], 0
    // Predicated region
    $region2: #{tpu_custom_call.1} parent=1 // pred_check
      _
    $region3: #{tpu_custom_call.1} parent=1 // pred_check_branch
      %10 = sbr.rel (0) target = $region5
    $region4: #{tpu_custom_call.1} parent=1 // pred_region
      _
    $region5: #{tpu_custom_call.1} parent=1 // pred_fallthru
      _
    // Predicated region
    $region6: #{tpu_custom_call.1} parent=1 // pred_check
      _
    $region7: #{tpu_custom_call.1} parent=1 // pred_check_branch
      %12 = sbr.rel (0) target = $region9
    $region8: #{tpu_custom_call.1} parent=1 // pred_region
      %s14 = ssub.s32 704, 704
      %15 = vsyncadd [#allocation3], %s14
      %s17 = sshll.u32 [#allocation2], 4
      %s18 = int_to_ptr.vmem [resolvable:$true] %s17
      %20 = dma.hbm_to_vmem [thread:$0]  %s1, 704, %s18, [#allocation3]
    $region9: #{tpu_custom_call.1} parent=1 // pred_fallthru
      _
    // Predicated region
    $region10: #{tpu_custom_call.1} parent=1 // pred_check
      _
    $region11: #{tpu_custom_call.1} parent=1 // pred_check_branch
      %22 = sbr.rel (0) target = $region13
    $region12: #{tpu_custom_call.1} parent=1 // pred_region
      %23 = dma.done [#allocation3], 704
    $region13: #{tpu_custom_call.1} parent=1 // pred_fallthru
      _
    %v24 = vld [vmem:[%s0] sm:$0xff]
    %v25 = vld [vmem:[%s0 + $0x8] sm:$0xff]
    %v26 = vld [vmem:[#allocation2] ss:$4 sm:$0xff]
    %s27 = scalar_lea.vmem [#allocation2], 32
    %v28 = vld [vmem:[%s27] ss:$4 sm:$0x7]
    %s29 = scalar_lea.vmem [#allocation2], 1
    %v30 = vld [vmem:[%s29] ss:$4 sm:$0xff]
    %s31 = scalar_lea.vmem [#allocation2], 33
    %v32 = vld [vmem:[%s31] ss:$4 sm:$0x7]
    %s33 = scalar_lea.vmem [#allocation2], 2
    %v34 = vld [vmem:[%s33] ss:$4 sm:$0xff]
    %s35 = scalar_lea.vmem [#allocation2], 34
    %v36 = vld [vmem:[%s35] ss:$4 sm:$0x7]
    %s37 = scalar_lea.vmem [#allocation2], 3
    %v38 = vld [vmem:[%s37] ss:$4 sm:$0xff]
    %s39 = scalar_lea.vmem [#allocation2], 35
    %v40 = vld [vmem:[%s39] ss:$4 sm:$0x7]
    %42 = vset.pattern.permute.xlu0 0
    %43 = vperm.xlu0 %42, %v24
    %v44 = vpop.permute.xlu0 %43
    %47 = vset.pattern.permute.xlu0 0
    %48 = vperm.xlu0 %47, %v25
    %v49 = vpop.permute.xlu0 %48
    %v53 = vlaneseq
    %v54 = vshrl.u32 %v53, 7
    %v55 = vsub.s32 0, %v54
    %v56 = vrot.slane %v38, %v55
    %v57 = vlaneseq
    %v58 = vshrl.u32 %v57, 7
    %v59 = vsub.s32 1, %v58
    %v60 = vrot.slane %v38, %v59
    %v61 = vlaneseq
    %v62 = vshrl.u32 %v61, 7
    %v63 = vsub.s32 2, %v62
    %v64 = vrot.slane %v38, %v63
    %v65 = vlaneseq
    %v66 = vshrl.u32 %v65, 7
    %v67 = vsub.s32 3, %v66
    %v68 = vrot.slane %v38, %v67
    %v69 = vlaneseq
    %v70 = vshrl.u32 %v69, 7
    %v71 = vsub.s32 4, %v70
    %v72 = vrot.slane %v38, %v71
    %v73 = vlaneseq
    %v74 = vshrl.u32 %v73, 7
    %v75 = vsub.s32 5, %v74
    %v76 = vrot.slane %v38, %v75
    %v77 = vlaneseq
    %v78 = vshrl.u32 %v77, 7
    %v79 = vsub.s32 6, %v78
    %v80 = vrot.slane %v38, %v79
    %v81 = vlaneseq
    %v82 = vshrl.u32 %v81, 7
    %v83 = vsub.s32 7, %v82
    %v84 = vrot.slane %v38, %v83
    %v85 = vlaneseq
    %v86 = vshrl.u32 %v85, 7
    %v87 = vsub.s32 0, %v86
    %v88 = vrot.slane %v40, %v87
    %v89 = vlaneseq
    %v90 = vshrl.u32 %v89, 7
    %v91 = vsub.s32 1, %v90
    %v92 = vrot.slane %v40, %v91
    %v93 = vlaneseq
    %v94 = vshrl.u32 %v93, 7
    %v95 = vsub.s32 2, %v94
    %v96 = vrot.slane %v40, %v95
    %v108 = vmul.f32 %v44, %v56
    %v109 = vmul.f32 %v44, %v60
    %v110 = vmul.f32 %v44, %v64
    %v111 = vmul.f32 %v44, %v68
    %v112 = vmul.f32 %v44, %v72
    %v113 = vmul.f32 %v44, %v76
    %v114 = vmul.f32 %v44, %v80
    %v115 = vmul.f32 %v44, %v84
    %v116 = vmul.f32 %v44, %v88
    %v117 = vmul.f32 %v44, %v92
    %v118 = vmul.f32 %v44, %v96
    %v119 = vmul.f32 %v49, %v56
    %v120 = vmul.f32 %v49, %v60
    %v121 = vmul.f32 %v49, %v64
    %v122 = vmul.f32 %v49, %v68
    %v123 = vmul.f32 %v49, %v72
    %v124 = vmul.f32 %v49, %v76
    %v125 = vmul.f32 %v49, %v80
    %v126 = vmul.f32 %v49, %v84
    %v127 = vmul.f32 %v49, %v88
    %v128 = vmul.f32 %v49, %v92
    %v129 = vmul.f32 %v49, %v96
    %v132 = vlaneseq
    %v133 = vshrl.u32 %v132, 7
    %v134 = vsub.s32 0, %v133
    %v135 = vrot.slane %v34, %v134
    %v136 = vlaneseq
    %v137 = vshrl.u32 %v136, 7
    %v138 = vsub.s32 1, %v137
    %v139 = vrot.slane %v34, %v138
    %v140 = vlaneseq
    %v141 = vshrl.u32 %v140, 7
    %v142 = vsub.s32 2, %v141
    %v143 = vrot.slane %v34, %v142
    %v144 = vlaneseq
    %v145 = vshrl.u32 %v144, 7
    %v146 = vsub.s32 3, %v145
    %v147 = vrot.slane %v34, %v146
    %v148 = vlaneseq
    %v149 = vshrl.u32 %v148, 7
    %v150 = vsub.s32 4, %v149
    %v151 = vrot.slane %v34, %v150
    %v152 = vlaneseq
    %v153 = vshrl.u32 %v152, 7
    %v154 = vsub.s32 5, %v153
    %v155 = vrot.slane %v34, %v154
    %v156 = vlaneseq
    %v157 = vshrl.u32 %v156, 7
    %v158 = vsub.s32 6, %v157
    %v159 = vrot.slane %v34, %v158
    %v160 = vlaneseq
    %v161 = vshrl.u32 %v160, 7
    %v162 = vsub.s32 7, %v161
    %v163 = vrot.slane %v34, %v162
    %v164 = vlaneseq
    %v165 = vshrl.u32 %v164, 7
    %v166 = vsub.s32 0, %v165
    %v167 = vrot.slane %v36, %v166
    %v168 = vlaneseq
    %v169 = vshrl.u32 %v168, 7
    %v170 = vsub.s32 1, %v169
    %v171 = vrot.slane %v36, %v170
    %v172 = vlaneseq
    %v173 = vshrl.u32 %v172, 7
    %v174 = vsub.s32 2, %v173
    %v175 = vrot.slane %v36, %v174
    %v187 = vadd.f32 %v135, %v108
    %v188 = vadd.f32 %v139, %v109
    %v189 = vadd.f32 %v143, %v110
    %v190 = vadd.f32 %v147, %v111
    %v191 = vadd.f32 %v151, %v112
    %v192 = vadd.f32 %v155, %v113
    %v193 = vadd.f32 %v159, %v114
    %v194 = vadd.f32 %v163, %v115
    %v195 = vadd.f32 %v167, %v116
    %v196 = vadd.f32 %v171, %v117
    %v197 = vadd.f32 %v175, %v118
    %v198 = vadd.f32 %v135, %v119
    %v199 = vadd.f32 %v139, %v120
    %v200 = vadd.f32 %v143, %v121
    %v201 = vadd.f32 %v147, %v122
    %v202 = vadd.f32 %v151, %v123
    %v203 = vadd.f32 %v155, %v124
    %v204 = vadd.f32 %v159, %v125
    %v205 = vadd.f32 %v163, %v126
    %v206 = vadd.f32 %v167, %v127
    %v207 = vadd.f32 %v171, %v128
    %v208 = vadd.f32 %v175, %v129
    %v209 = vmul.f32 %v44, %v187
    %v210 = vmul.f32 %v44, %v188
    %v211 = vmul.f32 %v44, %v189
    %v212 = vmul.f32 %v44, %v190
    %v213 = vmul.f32 %v44, %v191
    %v214 = vmul.f32 %v44, %v192
    %v215 = vmul.f32 %v44, %v193
    %v216 = vmul.f32 %v44, %v194
    %v217 = vmul.f32 %v44, %v195
    %v218 = vmul.f32 %v44, %v196
    %v219 = vmul.f32 %v44, %v197
    %v220 = vmul.f32 %v49, %v198
    %v221 = vmul.f32 %v49, %v199
    %v222 = vmul.f32 %v49, %v200
    %v223 = vmul.f32 %v49, %v201
    %v224 = vmul.f32 %v49, %v202
    %v225 = vmul.f32 %v49, %v203
    %v226 = vmul.f32 %v49, %v204
    %v227 = vmul.f32 %v49, %v205
    %v228 = vmul.f32 %v49, %v206
    %v229 = vmul.f32 %v49, %v207
    %v230 = vmul.f32 %v49, %v208
    %v233 = vlaneseq
    %v234 = vshrl.u32 %v233, 7
    %v235 = vsub.s32 0, %v234
    %v236 = vrot.slane %v30, %v235
    %v237 = vlaneseq
    %v238 = vshrl.u32 %v237, 7
    %v239 = vsub.s32 1, %v238
    %v240 = vrot.slane %v30, %v239
    %v241 = vlaneseq
    %v242 = vshrl.u32 %v241, 7
    %v243 = vsub.s32 2, %v242
    %v244 = vrot.slane %v30, %v243
    %v245 = vlaneseq
    %v246 = vshrl.u32 %v245, 7
    %v247 = vsub.s32 3, %v246
    %v248 = vrot.slane %v30, %v247
    %v249 = vlaneseq
    %v250 = vshrl.u32 %v249, 7
    %v251 = vsub.s32 4, %v250
    %v252 = vrot.slane %v30, %v251
    %v253 = vlaneseq
    %v254 = vshrl.u32 %v253, 7
    %v255 = vsub.s32 5, %v254
    %v256 = vrot.slane %v30, %v255
    %v257 = vlaneseq
    %v258 = vshrl.u32 %v257, 7
    %v259 = vsub.s32 6, %v258
    %v260 = vrot.slane %v30, %v259
    %v261 = vlaneseq
    %v262 = vshrl.u32 %v261, 7
    %v263 = vsub.s32 7, %v262
    %v264 = vrot.slane %v30, %v263
    %v265 = vlaneseq
    %v266 = vshrl.u32 %v265, 7
    %v267 = vsub.s32 0, %v266
    %v268 = vrot.slane %v32, %v267
    %v269 = vlaneseq
    %v270 = vshrl.u32 %v269, 7
    %v271 = vsub.s32 1, %v270
    %v272 = vrot.slane %v32, %v271
    %v273 = vlaneseq
    %v274 = vshrl.u32 %v273, 7
    %v275 = vsub.s32 2, %v274
    %v276 = vrot.slane %v32, %v275
    %v288 = vadd.f32 %v236, %v209
    %v289 = vadd.f32 %v240, %v210
    %v290 = vadd.f32 %v244, %v211
    %v291 = vadd.f32 %v248, %v212
    %v292 = vadd.f32 %v252, %v213
    %v293 = vadd.f32 %v256, %v214
    %v294 = vadd.f32 %v260, %v215
    %v295 = vadd.f32 %v264, %v216
    %v296 = vadd.f32 %v268, %v217
    %v297 = vadd.f32 %v272, %v218
    %v298 = vadd.f32 %v276, %v219
    %v299 = vadd.f32 %v236, %v220
    %v300 = vadd.f32 %v240, %v221
    %v301 = vadd.f32 %v244, %v222
    %v302 = vadd.f32 %v248, %v223
    %v303 = vadd.f32 %v252, %v224
    %v304 = vadd.f32 %v256, %v225
    %v305 = vadd.f32 %v260, %v226
    %v306 = vadd.f32 %v264, %v227
    %v307 = vadd.f32 %v268, %v228
    %v308 = vadd.f32 %v272, %v229
    %v309 = vadd.f32 %v276, %v230
    %v310 = vmul.f32 %v44, %v288
    %v311 = vmul.f32 %v44, %v289
    %v312 = vmul.f32 %v44, %v290
    %v313 = vmul.f32 %v44, %v291
    %v314 = vmul.f32 %v44, %v292
    %v315 = vmul.f32 %v44, %v293
    %v316 = vmul.f32 %v44, %v294
    %v317 = vmul.f32 %v44, %v295
    %v318 = vmul.f32 %v44, %v296
    %v319 = vmul.f32 %v44, %v297
    %v320 = vmul.f32 %v44, %v298
    %v321 = vmul.f32 %v49, %v299
    %v322 = vmul.f32 %v49, %v300
    %v323 = vmul.f32 %v49, %v301
    %v324 = vmul.f32 %v49, %v302
    %v325 = vmul.f32 %v49, %v303
    %v326 = vmul.f32 %v49, %v304
    %v327 = vmul.f32 %v49, %v305
    %v328 = vmul.f32 %v49, %v306
    %v329 = vmul.f32 %v49, %v307
    %v330 = vmul.f32 %v49, %v308
    %v331 = vmul.f32 %v49, %v309
    %v334 = vlaneseq
    %v335 = vshrl.u32 %v334, 7
    %v336 = vsub.s32 0, %v335
    %v337 = vrot.slane %v26, %v336
    %v338 = vlaneseq
    %v339 = vshrl.u32 %v338, 7
    %v340 = vsub.s32 1, %v339
    %v341 = vrot.slane %v26, %v340
    %v342 = vlaneseq
    %v343 = vshrl.u32 %v342, 7
    %v344 = vsub.s32 2, %v343
    %v345 = vrot.slane %v26, %v344
    %v346 = vlaneseq
    %v347 = vshrl.u32 %v346, 7
    %v348 = vsub.s32 3, %v347
    %v349 = vrot.slane %v26, %v348
    %v350 = vlaneseq
    %v351 = vshrl.u32 %v350, 7
    %v352 = vsub.s32 4, %v351
    %v353 = vrot.slane %v26, %v352
    %v354 = vlaneseq
    %v355 = vshrl.u32 %v354, 7
    %v356 = vsub.s32 5, %v355
    %v357 = vrot.slane %v26, %v356
    %v358 = vlaneseq
    %v359 = vshrl.u32 %v358, 7
    %v360 = vsub.s32 6, %v359
    %v361 = vrot.slane %v26, %v360
    %v362 = vlaneseq
    %v363 = vshrl.u32 %v362, 7
    %v364 = vsub.s32 7, %v363
    %v365 = vrot.slane %v26, %v364
    %v366 = vlaneseq
    %v367 = vshrl.u32 %v366, 7
    %v368 = vsub.s32 0, %v367
    %v369 = vrot.slane %v28, %v368
    %v370 = vlaneseq
    %v371 = vshrl.u32 %v370, 7
    %v372 = vsub.s32 1, %v371
    %v373 = vrot.slane %v28, %v372
    %v374 = vlaneseq
    %v375 = vshrl.u32 %v374, 7
    %v376 = vsub.s32 2, %v375
    %v377 = vrot.slane %v28, %v376
    %v389 = vadd.f32 %v337, %v310
    %v390 = vadd.f32 %v341, %v311
    %v391 = vadd.f32 %v345, %v312
    %v392 = vadd.f32 %v349, %v313
    %v393 = vadd.f32 %v353, %v314
    %v394 = vadd.f32 %v357, %v315
    %v395 = vadd.f32 %v361, %v316
    %v396 = vadd.f32 %v365, %v317
    %v397 = vadd.f32 %v369, %v318
    %v398 = vadd.f32 %v373, %v319
    %v399 = vadd.f32 %v377, %v320
    %v400 = vadd.f32 %v337, %v321
    %v401 = vadd.f32 %v341, %v322
    %v402 = vadd.f32 %v345, %v323
    %v403 = vadd.f32 %v349, %v324
    %v404 = vadd.f32 %v353, %v325
    %v405 = vadd.f32 %v357, %v326
    %v406 = vadd.f32 %v361, %v327
    %v407 = vadd.f32 %v365, %v328
    %v408 = vadd.f32 %v369, %v329
    %v409 = vadd.f32 %v373, %v330
    %v410 = vadd.f32 %v377, %v331
    %v411 = vpack.c.bf16 %v400, %v389
    %v412 = vpack.c.bf16 %v401, %v390
    %v413 = vpack.c.bf16 %v402, %v391
    %v414 = vpack.c.bf16 %v403, %v392
    %v415 = vpack.c.bf16 %v404, %v393
    %v416 = vpack.c.bf16 %v405, %v394
    %v417 = vpack.c.bf16 %v406, %v395
    %v418 = vpack.c.bf16 %v407, %v396
    %v419 = vpack.c.bf16 %v408, %v397
    %v420 = vpack.c.bf16 %v409, %v398
    %v421 = vpack.c.bf16 %v410, %v399
    %v433 = vunpack.c.l.b16 %v411
    %v434 = vunpack.c.l.b16 %v412
    %v435 = vunpack.c.l.b16 %v413
    %v436 = vunpack.c.l.b16 %v414
    %v437 = vunpack.c.l.b16 %v415
    %v438 = vunpack.c.l.b16 %v416
    %v439 = vunpack.c.l.b16 %v417
    %v440 = vunpack.c.l.b16 %v418
    %v441 = vunpack.c.l.b16 %v419
    %v442 = vunpack.c.l.b16 %v420
    %v443 = vunpack.c.l.b16 %v421
    %v444 = vunpack.c.h.b16 %v411
    %v445 = vunpack.c.h.b16 %v412
    %v446 = vunpack.c.h.b16 %v413
    %v447 = vunpack.c.h.b16 %v414
    %v448 = vunpack.c.h.b16 %v415
    %v449 = vunpack.c.h.b16 %v416
    %v450 = vunpack.c.h.b16 %v417
    %v451 = vunpack.c.h.b16 %v418
    %v452 = vunpack.c.h.b16 %v419
    %v453 = vunpack.c.h.b16 %v420
    %v454 = vunpack.c.h.b16 %v421
    %v455 = vpack.c.b16 %v434, %v433
    %v456 = vpack.c.b16 %v436, %v435
    %v457 = vpack.c.b16 %v438, %v437
    %v458 = vpack.c.b16 %v440, %v439
    %v459 = vpack.c.b16 %v442, %v441
    %v460 = vpack.c.b16 %v443, %v443
    %v461 = vpack.c.b16 %v445, %v444
    %v462 = vpack.c.b16 %v447, %v446
    %v463 = vpack.c.b16 %v449, %v448
    %v464 = vpack.c.b16 %v451, %v450
    %v465 = vpack.c.b16 %v453, %v452
    %v466 = vpack.c.b16 %v454, %v454
    %479 = vst [vmem:[#allocation5] sm:$0xff] %v455
    %480 = vst [vmem:[#allocation5 + $0x8] sm:$0xff] %v456
    %481 = vst [vmem:[#allocation5 + $0x10] sm:$0xff] %v457
    %482 = vst [vmem:[#allocation5 + $0x18] sm:$0xff] %v458
    %483 = vst [vmem:[#allocation5 + $0x20] sm:$0xff] %v459
    %vm484 = vcmask 551936
    %485 = vst.msk [vmem:[#allocation5 + $0x28] sm:$0xf] %vm484, %v460
    %486 = vst [vmem:[#allocation5 + $0x2c] sm:$0xff] %v461
    %487 = vst [vmem:[#allocation5 + $0x34] sm:$0xff] %v462
    %488 = vst [vmem:[#allocation5 + $0x3c] sm:$0xff] %v463
    %489 = vst [vmem:[#allocation5 + $0x44] sm:$0xff] %v464
    %490 = vst [vmem:[#allocation5 + $0x4c] sm:$0xff] %v465
    %491 = vst.msk [vmem:[#allocation5 + $0x54] sm:$0xf] %vm484, %v466
    // Predicated region
    $region14: #{tpu_custom_call.1} parent=1 // pred_check
      _
    $region15: #{tpu_custom_call.1} parent=1 // pred_check_branch
      %493 = sbr.rel (0) target = $region17
    $region16: #{tpu_custom_call.1} parent=1 // pred_region
      %s495 = ssub.s32 1408, 1408
      %496 = vsyncadd [#allocation4], %s495
      %s497 = sshll.u32 [#allocation5], 4
      %s498 = int_to_ptr.vmem [resolvable:$true] %s497
      %503 = dma.vmem_to_hbm [thread:$0]  %s498, 1408, %s2, [#allocation4], 704, 704, 44
    $region17: #{tpu_custom_call.1} parent=1 // pred_fallthru
      _
    // Predicated region
    $region18: #{tpu_custom_call.1} parent=1 // pred_check
      _
    $region19: #{tpu_custom_call.1} parent=1 // pred_check_branch
      %505 = sbr.rel (0) target = $region21
    $region20: #{tpu_custom_call.1} parent=1 // pred_region
      %506 = dma.done [#allocation4], 1408
    $region21: #{tpu_custom_call.1} parent=1 // pred_fallthru
      _
    %507 = vsyncpa [#allocation3], 1
    %508 = vsyncpa [#allocation4], 1

</llo_original>
